<compile_context>
chip_gen: v7x
topology: tpu7x:2x2x1
jax: 0.10.0
libtpu: 0.0.40
codegen_flags: <defaults>
</compile_context>

<pallas_src>
import math
from functools import partial

import jax
import jax.numpy as jnp
from jax.experimental import pallas as pl
from jax.experimental.pallas import tpu as pltpu


def _round_up(x, m):
    return (x + m - 1) // m * m


# ---------------------------------------------------------------------------
# Pallas kernel: trunk (3 matmuls) + fused dueling heads (2 matmuls) + combine.
# ---------------------------------------------------------------------------
def noisy_qnet_kernel(x_ref,
                      w1_ref, b1_ref,
                      w2_ref, b2_ref,
                      w3_ref, b3_ref,
                      wh1_ref, bh1_ref,
                      wh2_ref, bh2_ref,
                      out_ref, *, n_out):
    bf16 = jnp.bfloat16
    x = x_ref[...]                                     # (Bb, n_in_pad) bf16

    # fc: Linear(n_in,128) -> ReLU -> NoisyLinear(128,128) -> ReLU -> NoisyLinear(128,n_mid)
    h = jnp.dot(x, w1_ref[...], preferred_element_type=jnp.float32) + b1_ref[...]
    h = jnp.maximum(h, 0.0)
    h = jnp.dot(h.astype(bf16), w2_ref[...], preferred_element_type=jnp.float32) + b2_ref[...]
    h = jnp.maximum(h, 0.0)
    feat = jnp.dot(h.astype(bf16), w3_ref[...], preferred_element_type=jnp.float32) + b3_ref[...]

    # fused dueling heads, stage 1: [wa1 | wv1] -> (Bb, 256), single ReLU
    heads = jnp.dot(feat.astype(bf16), wh1_ref[...], preferred_element_type=jnp.float32) + bh1_ref[...]
    heads = jnp.maximum(heads, 0.0)

    # stage 2: block-diagonal [[wa2,0],[0,wv2]] (zero-padded to 128 cols each)
    av = jnp.dot(heads.astype(bf16), wh2_ref[...], preferred_element_type=jnp.float32) + bh2_ref[...]

    n_pad = out_ref.shape[1]                           # 128 (lane-dense)
    adv = av[:, :n_pad]
    val = av[:, n_pad:]

    # padded adv columns are exact zeros, so sum * (1/n_out) == mean over true n_out
    adv_mean = jnp.sum(adv, axis=1, keepdims=True) * (1.0 / n_out)
    out_ref[...] = val + adv - adv_mean


def noisy_qnet_forward(state, kparams, *, n_out, block_b=256):
    """Fused Pallas forward. Returns (output[:, :8], output[:, 8:])."""
    if state.ndim == 1:
        state = state[None]
    B, n_in = state.shape
    n_in_pad = kparams["w1"].shape[0]
    n_pad = kparams["wh2"].shape[1] // 2

    # batch block: pad B to a multiple of 8 sublanes (and of the block size)
    bb = min(block_b, _round_up(B, 8))
    B_pad = _round_up(B, bb)

    x = jnp.zeros((B_pad, n_in_pad), jnp.bfloat16)
    x = x.at[:B, :n_in].set(state.astype(jnp.bfloat16))

    args = (x,
            kparams["w1"], kparams["b1"],
            kparams["w2"], kparams["b2"],
            kparams["w3"], kparams["b3"],
            kparams["wh1"], kparams["bh1"],
            kparams["wh2"], kparams["bh2"])

    # state/output are blocked over batch; weights/biases are whole-array blocks
    # (block index constant -> stay resident across grid steps).
    in_specs = [pl.BlockSpec((bb, n_in_pad), lambda i: (i, 0))]
    in_specs += [pl.BlockSpec(a.shape, lambda i: (0, 0)) for a in args[1:]]
    out_specs = pl.BlockSpec((bb, n_pad), lambda i: (i, 0))

    out = pl.pallas_call(
        partial(noisy_qnet_kernel, n_out=n_out),
        out_shape=jax.ShapeDtypeStruct((B_pad, n_pad), jnp.float32),
        grid=(B_pad // bb,),
        in_specs=in_specs,
        out_specs=out_specs,
        compiler_params=pltpu.CompilerParams(dimension_semantics=("parallel",)),
    )(*args)

    out = out[:B, :n_out]
    return out[:, :8], out[:, 8:]


# ---------------------------------------------------------------------------
# Parameter construction (mirrors the PyTorch __init__ / NoisyLinear init).
# Weights stored as (in_features, out_features) so y = x @ W + b == F.linear.
# ---------------------------------------------------------------------------
def _scale_noise(key, size):
    x = jax.random.normal(key, (size,), dtype=jnp.float32)
    return jnp.sign(x) * jnp.sqrt(jnp.abs(x))


def _linear_params(key, in_f, out_f):
    kw, kb = jax.random.split(key)
    bound = 1.0 / math.sqrt(in_f)
    w = jax.random.uniform(kw, (in_f, out_f), jnp.float32, -bound, bound)
    b = jax.random.uniform(kb, (1, out_f), jnp.float32, -bound, bound)
    return w, b


def _noisy_linear_params(key, in_f, out_f, std_init=0.3, training=True):
    kmu_w, kmu_b, kin, kout, kbe = jax.random.split(key, 5)
    mu_range = 1.0 / math.sqrt(in_f)
    w_mu = jax.random.uniform(kmu_w, (in_f, out_f), jnp.float32, -mu_range, mu_range)
    b_mu = jax.random.uniform(kmu_b, (1, out_f), jnp.float32, -mu_range, mu_range)
    w_sigma = jnp.full((in_f, out_f), std_init / math.sqrt(in_f), jnp.float32)
    b_sigma = jnp.full((1, out_f), std_init / math.sqrt(out_f), jnp.float32)
    eps_in = _scale_noise(kin, in_f)
    eps_out = _scale_noise(kout, out_f)
    w_eps = jnp.outer(eps_in, eps_out)          # (in, out) == (eps_out ger eps_in).T
    b_eps = _scale_noise(kbe, out_f)[None, :]
    if training:
        return w_mu + w_sigma * w_eps, b_mu + b_sigma * b_eps
    return w_mu, b_mu


def make_params(key, n_in, n_mid=128, n_out=20, std_init=0.3):
    keys = jax.random.split(key, 7)
    p = {}
    p["w1"], p["b1"] = _linear_params(keys[0], n_in, 128)
    p["w2"], p["b2"] = _noisy_linear_params(keys[1], 128, 128, std_init)
    p["w3"], p["b3"] = _noisy_linear_params(keys[2], 128, n_mid, std_init)
    p["wa1"], p["ba1"] = _noisy_linear_params(keys[3], n_mid, 128, std_init)
    p["wa2"], p["ba2"] = _linear_params(keys[4], 128, n_out)
    p["wv1"], p["bv1"] = _noisy_linear_params(keys[5], n_mid, 128, std_init)
    p["wv2"], p["bv2"] = _linear_params(keys[6], 128, n_out)
    # TODO(synk): nn.LSTM (self.mlp) and h0/c0 are created but never used in forward(); omitted.
    return p


def prepare_kernel_params(p, n_out):
    """Fuse heads, zero-pad to lane-dense shapes, cast weights to bf16."""
    bf16 = jnp.bfloat16
    n_in = p["w1"].shape[0]
    n_mid = p["w3"].shape[1]
    assert n_mid % 128 == 0, "n_mid is expected to be a multiple of 128"
    n_in_pad = _round_up(n_in, 128)
    n_pad = _round_up(n_out, 128)

    # pad input features (zero rows contribute exactly nothing)
    w1 = jnp.zeros((n_in_pad, 128), jnp.float32).at[:n_in].set(p["w1"])

    # fused head stage 1: [wa1 | wv1]
    wh1 = jnp.concatenate([p["wa1"], p["wv1"]], axis=1)          # (n_mid, 256)
    bh1 = jnp.concatenate([p["ba1"], p["bv1"]], axis=1)          # (1, 256)

    # fused head stage 2: block-diagonal, zero-padded to 128-wide outputs
    wh2 = jnp.zeros((256, 2 * n_pad), jnp.float32)
    wh2 = wh2.at[:128, :n_out].set(p["wa2"])
    wh2 = wh2.at[128:, n_pad:n_pad + n_out].set(p["wv2"])
    bh2 = jnp.zeros((1, 2 * n_pad), jnp.float32)
    bh2 = bh2.at[:, :n_out].set(p["ba2"])
    bh2 = bh2.at[:, n_pad:n_pad + n_out].set(p["bv2"])

    return {
        "w1": w1.astype(bf16), "b1": p["b1"],
        "w2": p["w2"].astype(bf16), "b2": p["b2"],
        "w3": p["w3"].astype(bf16), "b3": p["b3"],
        "wh1": wh1.astype(bf16), "bh1": bh1,
        "wh2": wh2.astype(bf16), "bh2": bh2,
    }


# ---------------------------------------------------------------------------
# Pure-JAX reference (unfused module graph; same bf16-in / f32-accumulate
# matmul numerics as the kernel) for a correctness sanity check.
# ---------------------------------------------------------------------------
def reference_forward(state, p):
    bf16 = jnp.bfloat16

    def mm(x, w):
        return jnp.dot(x.astype(bf16), w.astype(bf16),
                       preferred_element_type=jnp.float32)

    if state.ndim == 1:
        state = state[None]
    h = jax.nn.relu(mm(state, p["w1"]) + p["b1"])
    h = jax.nn.relu(mm(h, p["w2"]) + p["b2"])
    feat = mm(h, p["w3"]) + p["b3"]
    adv = mm(jax.nn.relu(mm(feat, p["wa1"]) + p["ba1"]), p["wa2"]) + p["ba2"]
    val = mm(jax.nn.relu(mm(feat, p["wv1"]) + p["bv1"]), p["wv2"]) + p["bv2"]
    out = val + adv - jnp.mean(adv, axis=1, keepdims=True)
    return out[:, :8], out[:, 8:]


if __name__ == "__main__":
    key = jax.random.PRNGKey(0)
    k_param, k_state = jax.random.split(key)

    B, n_in, n_mid, n_out = 8, 32, 128, 20
    params = make_params(k_param, n_in=n_in, n_mid=n_mid, n_out=n_out, std_init=0.3)
    kparams = prepare_kernel_params(params, n_out=n_out)
    state = jax.random.normal(k_state, (B, n_in), dtype=jnp.float32)

    out_a, out_b = jax.block_until_ready(
        noisy_qnet_forward(state, kparams, n_out=n_out))
    ref_a, ref_b = reference_forward(state, params)

    assert out_a.shape == (B, 8) and out_b.shape == (B, n_out - 8)
    assert jnp.allclose(out_a, ref_a, atol=2e-3, rtol=2e-3), \
        float(jnp.max(jnp.abs(out_a - ref_a)))
    assert jnp.allclose(out_b, ref_b, atol=2e-3, rtol=2e-3), \
        float(jnp.max(jnp.abs(out_b - ref_b)))

    print("KERNEL_OK")
</pallas_src>

<mosaic_0001>
module attributes {stable_mosaic.version = 11 : i64} {
  func.func @noisy_qnet_kernel(%arg0: i32, %arg1: memref<8x128xbf16, #tpu.memory_space<vmem>>, %arg2: memref<128x128xbf16, #tpu.memory_space<vmem>>, %arg3: memref<1x128xf32, #tpu.memory_space<vmem>>, %arg4: memref<128x128xbf16, #tpu.memory_space<vmem>>, %arg5: memref<1x128xf32, #tpu.memory_space<vmem>>, %arg6: memref<128x128xbf16, #tpu.memory_space<vmem>>, %arg7: memref<1x128xf32, #tpu.memory_space<vmem>>, %arg8: memref<128x256xbf16, #tpu.memory_space<vmem>>, %arg9: memref<1x256xf32, #tpu.memory_space<vmem>>, %arg10: memref<256x256xbf16, #tpu.memory_space<vmem>>, %arg11: memref<1x256xf32, #tpu.memory_space<vmem>>, %arg12: memref<8x128xf32, #tpu.memory_space<vmem>>) attributes {dimension_semantics = [#tpu.dimension_semantics<parallel>], iteration_bounds = array<i64: 1>, scalar_prefetch = 0 : i64, scratch_operands = 0 : i64, tpu.core_type = #tpu.core_type<tc>, window_params = [{transform_indices = @transform_0, window_bounds = array<i64: 8, 128>}, {pipeline_mode = #tpu.pipeline_mode<synchronous>, transform_indices = @transform_1, window_bounds = array<i64: 128, 128>}, {pipeline_mode = #tpu.pipeline_mode<synchronous>, transform_indices = @transform_2, window_bounds = array<i64: 1, 128>}, {pipeline_mode = #tpu.pipeline_mode<synchronous>, transform_indices = @transform_3, window_bounds = array<i64: 128, 128>}, {pipeline_mode = #tpu.pipeline_mode<synchronous>, transform_indices = @transform_4, window_bounds = array<i64: 1, 128>}, {pipeline_mode = #tpu.pipeline_mode<synchronous>, transform_indices = @transform_5, window_bounds = array<i64: 128, 128>}, {pipeline_mode = #tpu.pipeline_mode<synchronous>, transform_indices = @transform_6, window_bounds = array<i64: 1, 128>}, {pipeline_mode = #tpu.pipeline_mode<synchronous>, transform_indices = @transform_7, window_bounds = array<i64: 128, 256>}, {pipeline_mode = #tpu.pipeline_mode<synchronous>, transform_indices = @transform_8, window_bounds = array<i64: 1, 256>}, {pipeline_mode = #tpu.pipeline_mode<synchronous>, transform_indices = @transform_9, window_bounds = array<i64: 256, 256>}, {pipeline_mode = #tpu.pipeline_mode<synchronous>, transform_indices = @transform_10, window_bounds = array<i64: 1, 256>}, {transform_indices = @transform_11, window_bounds = array<i64: 8, 128>}]} {
    %c0 = arith.constant 0 : index
    %c0_0 = arith.constant 0 : index
    %0 = vector.load %arg1[%c0, %c0_0] : memref<8x128xbf16, #tpu.memory_space<vmem>>, vector<8x128xbf16>
    %c0_1 = arith.constant 0 : index
    %c0_2 = arith.constant 0 : index
    %1 = vector.load %arg2[%c0_1, %c0_2] : memref<128x128xbf16, #tpu.memory_space<vmem>>, vector<128x128xbf16>
    %cst = arith.constant dense<0.000000e+00> : vector<8x128xf32>
    %2 = tpu.matmul %0, %1, %cst {dimension_numbers = #tpu.dot_dimension_numbers<[1], [0], [0], [1], [0, 0, 1, 1], [], []>} : vector<8x128xbf16>, vector<128x128xbf16>, vector<8x128xf32> -> vector<8x128xf32>
    %c0_3 = arith.constant 0 : index
    %c0_4 = arith.constant 0 : index
    %3 = vector.load %arg3[%c0_3, %c0_4] : memref<1x128xf32, #tpu.memory_space<vmem>>, vector<1x128xf32>
    %4 = vector.broadcast %3 : vector<1x128xf32> to vector<8x128xf32>
    %5 = arith.addf %2, %4 : vector<8x128xf32>
    %cst_5 = arith.constant 0.000000e+00 : f32
    %6 = vector.broadcast %cst_5 : f32 to vector<8x128xf32>
    %7 = arith.maximumf %5, %6 : vector<8x128xf32>
    %8 = arith.truncf %7 : vector<8x128xf32> to vector<8x128xbf16>
    %c0_6 = arith.constant 0 : index
    %c0_7 = arith.constant 0 : index
    %9 = vector.load %arg4[%c0_6, %c0_7] : memref<128x128xbf16, #tpu.memory_space<vmem>>, vector<128x128xbf16>
    %cst_8 = arith.constant dense<0.000000e+00> : vector<8x128xf32>
    %10 = tpu.matmul %8, %9, %cst_8 {dimension_numbers = #tpu.dot_dimension_numbers<[1], [0], [0], [1], [0, 0, 1, 1], [], []>} : vector<8x128xbf16>, vector<128x128xbf16>, vector<8x128xf32> -> vector<8x128xf32>
    %c0_9 = arith.constant 0 : index
    %c0_10 = arith.constant 0 : index
    %11 = vector.load %arg5[%c0_9, %c0_10] : memref<1x128xf32, #tpu.memory_space<vmem>>, vector<1x128xf32>
    %12 = vector.broadcast %11 : vector<1x128xf32> to vector<8x128xf32>
    %13 = arith.addf %10, %12 : vector<8x128xf32>
    %cst_11 = arith.constant 0.000000e+00 : f32
    %14 = vector.broadcast %cst_11 : f32 to vector<8x128xf32>
    %15 = arith.maximumf %13, %14 : vector<8x128xf32>
    %16 = arith.truncf %15 : vector<8x128xf32> to vector<8x128xbf16>
    %c0_12 = arith.constant 0 : index
    %c0_13 = arith.constant 0 : index
    %17 = vector.load %arg6[%c0_12, %c0_13] : memref<128x128xbf16, #tpu.memory_space<vmem>>, vector<128x128xbf16>
    %cst_14 = arith.constant dense<0.000000e+00> : vector<8x128xf32>
    %18 = tpu.matmul %16, %17, %cst_14 {dimension_numbers = #tpu.dot_dimension_numbers<[1], [0], [0], [1], [0, 0, 1, 1], [], []>} : vector<8x128xbf16>, vector<128x128xbf16>, vector<8x128xf32> -> vector<8x128xf32>
    %c0_15 = arith.constant 0 : index
    %c0_16 = arith.constant 0 : index
    %19 = vector.load %arg7[%c0_15, %c0_16] : memref<1x128xf32, #tpu.memory_space<vmem>>, vector<1x128xf32>
    %20 = vector.broadcast %19 : vector<1x128xf32> to vector<8x128xf32>
    %21 = arith.addf %18, %20 : vector<8x128xf32>
    %22 = arith.truncf %21 : vector<8x128xf32> to vector<8x128xbf16>
    %c0_17 = arith.constant 0 : index
    %c0_18 = arith.constant 0 : index
    %23 = vector.load %arg8[%c0_17, %c0_18] : memref<128x256xbf16, #tpu.memory_space<vmem>>, vector<128x256xbf16>
    %cst_19 = arith.constant dense<0.000000e+00> : vector<8x256xf32>
    %24 = tpu.matmul %22, %23, %cst_19 {dimension_numbers = #tpu.dot_dimension_numbers<[1], [0], [0], [1], [0, 0, 1, 1], [], []>} : vector<8x128xbf16>, vector<128x256xbf16>, vector<8x256xf32> -> vector<8x256xf32>
    %c0_20 = arith.constant 0 : index
    %c0_21 = arith.constant 0 : index
    %25 = vector.load %arg9[%c0_20, %c0_21] : memref<1x256xf32, #tpu.memory_space<vmem>>, vector<1x256xf32>
    %26 = vector.broadcast %25 : vector<1x256xf32> to vector<8x256xf32>
    %27 = arith.addf %24, %26 : vector<8x256xf32>
    %cst_22 = arith.constant 0.000000e+00 : f32
    %28 = vector.broadcast %cst_22 : f32 to vector<8x256xf32>
    %29 = arith.maximumf %27, %28 : vector<8x256xf32>
    %30 = arith.truncf %29 : vector<8x256xf32> to vector<8x256xbf16>
    %c0_23 = arith.constant 0 : index
    %c0_24 = arith.constant 0 : index
    %31 = vector.load %arg10[%c0_23, %c0_24] : memref<256x256xbf16, #tpu.memory_space<vmem>>, vector<256x256xbf16>
    %cst_25 = arith.constant dense<0.000000e+00> : vector<8x256xf32>
    %32 = tpu.matmul %30, %31, %cst_25 {dimension_numbers = #tpu.dot_dimension_numbers<[1], [0], [0], [1], [0, 0, 1, 1], [], []>} : vector<8x256xbf16>, vector<256x256xbf16>, vector<8x256xf32> -> vector<8x256xf32>
    %c0_26 = arith.constant 0 : index
    %c0_27 = arith.constant 0 : index
    %33 = vector.load %arg11[%c0_26, %c0_27] : memref<1x256xf32, #tpu.memory_space<vmem>>, vector<1x256xf32>
    %34 = vector.broadcast %33 : vector<1x256xf32> to vector<8x256xf32>
    %35 = arith.addf %32, %34 : vector<8x256xf32>
    %36 = vector.extract_strided_slice %35 {offsets = [0, 0], sizes = [8, 128], strides = [1, 1]} : vector<8x256xf32> to vector<8x128xf32>
    %37 = vector.extract_strided_slice %35 {offsets = [0, 128], sizes = [8, 128], strides = [1, 1]} : vector<8x256xf32> to vector<8x128xf32>
    %cst_28 = arith.constant dense<0.000000e+00> : vector<8xf32>
    %38 = vector.multi_reduction <add>, %36, %cst_28 [1] : vector<8x128xf32> to vector<8xf32>
    %39 = vector.shape_cast %38 : vector<8xf32> to vector<8x1xf32>
    %cst_29 = arith.constant 5.000000e-02 : f32
    %40 = vector.broadcast %cst_29 : f32 to vector<8x1xf32>
    %41 = arith.mulf %39, %40 : vector<8x1xf32>
    %42 = arith.addf %37, %36 : vector<8x128xf32>
    %43 = vector.broadcast %41 : vector<8x1xf32> to vector<8x128xf32>
    %44 = arith.subf %42, %43 : vector<8x128xf32>
    %c0_30 = arith.constant 0 : index
    %c0_31 = arith.constant 0 : index
    %45 = vector.load %arg12[%c0_30, %c0_31] : memref<8x128xf32, #tpu.memory_space<vmem>>, vector<8x128xf32>
    tpu.vector_store %arg12[%c0_30, %c0_31], %44 {strides = array<i32>} : memref<8x128xf32, #tpu.memory_space<vmem>>, vector<8x128xf32>,
    return
  }
  func.func @transform_0(%arg0: i32) -> (i32, i32) {
    %c0_i32 = arith.constant 0 : i32
    %c0_i32_0 = arith.constant 0 : i32
    return %arg0, %c0_i32 : i32, i32
  }
  func.func @transform_1(%arg0: i32) -> (i32, i32) {
    %c0_i32 = arith.constant 0 : i32
    %c0_i32_0 = arith.constant 0 : i32
    %c0_i32_1 = arith.constant 0 : i32
    return %c0_i32, %c0_i32_0 : i32, i32
  }
  func.func @transform_2(%arg0: i32) -> (i32, i32) {
    %c0_i32 = arith.constant 0 : i32
    %c0_i32_0 = arith.constant 0 : i32
    %c0_i32_1 = arith.constant 0 : i32
    return %c0_i32, %c0_i32_0 : i32, i32
  }
  func.func @transform_3(%arg0: i32) -> (i32, i32) {
    %c0_i32 = arith.constant 0 : i32
    %c0_i32_0 = arith.constant 0 : i32
    %c0_i32_1 = arith.constant 0 : i32
    return %c0_i32, %c0_i32_0 : i32, i32
  }
  func.func @transform_4(%arg0: i32) -> (i32, i32) {
    %c0_i32 = arith.constant 0 : i32
    %c0_i32_0 = arith.constant 0 : i32
    %c0_i32_1 = arith.constant 0 : i32
    return %c0_i32, %c0_i32_0 : i32, i32
  }
  func.func @transform_5(%arg0: i32) -> (i32, i32) {
    %c0_i32 = arith.constant 0 : i32
    %c0_i32_0 = arith.constant 0 : i32
    %c0_i32_1 = arith.constant 0 : i32
    return %c0_i32, %c0_i32_0 : i32, i32
  }
  func.func @transform_6(%arg0: i32) -> (i32, i32) {
    %c0_i32 = arith.constant 0 : i32
    %c0_i32_0 = arith.constant 0 : i32
    %c0_i32_1 = arith.constant 0 : i32
    return %c0_i32, %c0_i32_0 : i32, i32
  }
  func.func @transform_7(%arg0: i32) -> (i32, i32) {
    %c0_i32 = arith.constant 0 : i32
    %c0_i32_0 = arith.constant 0 : i32
    %c0_i32_1 = arith.constant 0 : i32
    return %c0_i32, %c0_i32_0 : i32, i32
  }
  func.func @transform_8(%arg0: i32) -> (i32, i32) {
    %c0_i32 = arith.constant 0 : i32
    %c0_i32_0 = arith.constant 0 : i32
    %c0_i32_1 = arith.constant 0 : i32
    return %c0_i32, %c0_i32_0 : i32, i32
  }
  func.func @transform_9(%arg0: i32) -> (i32, i32) {
    %c0_i32 = arith.constant 0 : i32
    %c0_i32_0 = arith.constant 0 : i32
    %c0_i32_1 = arith.constant 0 : i32
    return %c0_i32, %c0_i32_0 : i32, i32
  }
  func.func @transform_10(%arg0: i32) -> (i32, i32) {
    %c0_i32 = arith.constant 0 : i32
    %c0_i32_0 = arith.constant 0 : i32
    %c0_i32_1 = arith.constant 0 : i32
    return %c0_i32, %c0_i32_0 : i32, i32
  }
  func.func @transform_11(%arg0: i32) -> (i32, i32) {
    %c0_i32 = arith.constant 0 : i32
    %c0_i32_0 = arith.constant 0 : i32
    return %arg0, %c0_i32 : i32, i32
  }
}

</mosaic_0001>

<llo_original>
// kernel: tpu_custom_call.1
$region0: #{tpu_custom_call.1}
  #allocation0 [shape = 'u32[]', space=smem, size = 0x4, offset = 0x4, fixed_abs, tag = 'smem constant byte address 0x4 - core index']
  #allocation1 [shape = 'u32[144,128]{1,0:T(1,128)}', space=vmem, size = 0x12000, scoped, tag = 'internal scratch']
  %s0 = inlined_call_operand.hbm [shape: bf16[8,128], index: 0, kind: input, shape index: {}]
  %s1 = inlined_call_operand.hbm [shape: bf16[128,128], index: 1, kind: input, shape index: {}]
  %s2 = inlined_call_operand.vmem [shape: f32[1,128], index: 2, kind: input, shape index: {}]
  %s3 = inlined_call_operand.hbm [shape: bf16[128,128], index: 3, kind: input, shape index: {}]
  %s4 = inlined_call_operand.vmem [shape: f32[1,128], index: 4, kind: input, shape index: {}]
  %s5 = inlined_call_operand.hbm [shape: bf16[128,128], index: 5, kind: input, shape index: {}]
  %s6 = inlined_call_operand.vmem [shape: f32[1,128], index: 6, kind: input, shape index: {}]
  %s7 = inlined_call_operand.hbm [shape: bf16[128,256], index: 7, kind: input, shape index: {}]
  %s8 = inlined_call_operand.vmem [shape: f32[1,256], index: 8, kind: input, shape index: {}]
  %s9 = inlined_call_operand.hbm [shape: bf16[256,256], index: 9, kind: input, shape index: {}]
  %s10 = inlined_call_operand.vmem [shape: f32[1,256], index: 10, kind: input, shape index: {}]
  %s11 = inlined_call_operand.hbm [shape: f32[8,128], index: 11, kind: output, shape index: {}]
  %s12 = sld [smem:[#allocation0]]
  $region78: #{tpu_custom_call.1} parent=0
    _
  %s14 = ssub.s32 1, %s12
  %s15 = scalar_select 0, %s14, %s12
  $region1: #{tpu_custom_call.1} parent=0
    #allocation2 [shape = 'u8[2048]{0}', space=vmem, size = 0x800, scoped, tag = 'input window, operand 0, single buffered']
    #allocation3 [shape = 's32[1]{0}', space=sflag, size = 0x4, scoped, tag = 'scoped memory for tpu_custom_call.1']
    #allocation4 [shape = 's32[1]{0}', space=sflag, size = 0x4, scoped, tag = 'scoped memory for tpu_custom_call.1']
    #allocation5 [shape = 'u8[32768]{0}', space=vmem, size = 0x8000, scoped, tag = 'input window, operand 1, single buffered']
    #allocation6 [shape = 's32[1]{0}', space=sflag, size = 0x4, scoped, tag = 'scoped memory for tpu_custom_call.1']
    #allocation7 [shape = 'u8[32768]{0}', space=vmem, size = 0x8000, scoped, tag = 'input window, operand 3, single buffered']
    #allocation8 [shape = 'u8[32768]{0}', space=vmem, size = 0x8000, scoped, tag = 'input window, operand 5, single buffered']
    #allocation9 [shape = 's32[1]{0}', space=sflag, size = 0x4, scoped, tag = 'scoped memory for tpu_custom_call.1']
    #allocation10 [shape = 'u8[65536]{0}', space=vmem, size = 0x10000, scoped, tag = 'input window, operand 7, single buffered']
    #allocation11 [shape = 'u8[131072]{0}', space=vmem, size = 0x20000, scoped, tag = 'input window, operand 9, single buffered']
    #allocation12 [shape = 's32[1]{0}', space=sflag, size = 0x4, scoped, tag = 'scoped memory for tpu_custom_call.1']
    #allocation13 [shape = 'u8[4096]{0}', space=vmem, size = 0x1000, scoped, tag = 'output window, operand 0, single buffered']
    %16 = vsyncpa [#allocation3], 0
    %17 = vsyncpa [#allocation6], 0
    %18 = vsyncpa [#allocation9], 0
    %19 = vsyncpa [#allocation12], 0
    %20 = vsyncpa [#allocation4], 0
    // Predicated region
    $region2: #{tpu_custom_call.1} parent=1 // pred_check
      _
    $region3: #{tpu_custom_call.1} parent=1 // pred_check_branch
      %22 = sbr.rel (0) target = $region5
    $region4: #{tpu_custom_call.1} parent=1 // pred_region
      %s24 = ssub.s32 64, 64
      %25 = vsyncadd [#allocation3], %s24
      %s27 = sshll.u32 [#allocation2], 4
      %s28 = int_to_ptr.vmem [resolvable:$true] %s27
      %30 = dma.hbm_to_vmem [thread:$0]  %s0, 64, %s28, [#allocation3]
    $region5: #{tpu_custom_call.1} parent=1 // pred_fallthru
      _
    // Predicated region
    $region6: #{tpu_custom_call.1} parent=1 // pred_check
      _
    $region7: #{tpu_custom_call.1} parent=1 // pred_check_branch
      %32 = sbr.rel (0) target = $region9
    $region8: #{tpu_custom_call.1} parent=1 // pred_region
      %s34 = ssub.s32 1024, 1024
      %35 = vsyncadd [#allocation6], %s34
      %s36 = sshll.u32 [#allocation5], 4
      %s37 = int_to_ptr.vmem [resolvable:$true] %s36
      %42 = dma.hbm_to_vmem [thread:$0]  %s1, 1024, %s37, [#allocation6], 64, 64, 4
    $region9: #{tpu_custom_call.1} parent=1 // pred_fallthru
      _
    // Predicated region
    $region10: #{tpu_custom_call.1} parent=1 // pred_check
      _
    $region11: #{tpu_custom_call.1} parent=1 // pred_check_branch
      %44 = sbr.rel (0) target = $region13
    $region12: #{tpu_custom_call.1} parent=1 // pred_region
      _
    $region13: #{tpu_custom_call.1} parent=1 // pred_fallthru
      _
    // Predicated region
    $region14: #{tpu_custom_call.1} parent=1 // pred_check
      _
    $region15: #{tpu_custom_call.1} parent=1 // pred_check_branch
      %46 = sbr.rel (0) target = $region17
    $region16: #{tpu_custom_call.1} parent=1 // pred_region
      %s48 = ssub.s32 1024, 1024
      %49 = vsyncadd [#allocation6], %s48
      %s50 = sshll.u32 [#allocation7], 4
      %s51 = int_to_ptr.vmem [resolvable:$true] %s50
      %56 = dma.hbm_to_vmem [thread:$0]  %s3, 1024, %s51, [#allocation6], 64, 64, 4
    $region17: #{tpu_custom_call.1} parent=1 // pred_fallthru
      _
    // Predicated region
    $region18: #{tpu_custom_call.1} parent=1 // pred_check
      _
    $region19: #{tpu_custom_call.1} parent=1 // pred_check_branch
      %58 = sbr.rel (0) target = $region21
    $region20: #{tpu_custom_call.1} parent=1 // pred_region
      _
    $region21: #{tpu_custom_call.1} parent=1 // pred_fallthru
      _
    // Predicated region
    $region22: #{tpu_custom_call.1} parent=1 // pred_check
      _
    $region23: #{tpu_custom_call.1} parent=1 // pred_check_branch
      %60 = sbr.rel (0) target = $region25
    $region24: #{tpu_custom_call.1} parent=1 // pred_region
      %s62 = ssub.s32 1024, 1024
      %63 = vsyncadd [#allocation9], %s62
      %s64 = sshll.u32 [#allocation8], 4
      %s65 = int_to_ptr.vmem [resolvable:$true] %s64
      %70 = dma.hbm_to_vmem [thread:$0]  %s5, 1024, %s65, [#allocation9], 64, 64, 4
    $region25: #{tpu_custom_call.1} parent=1 // pred_fallthru
      _
    // Predicated region
    $region26: #{tpu_custom_call.1} parent=1 // pred_check
      _
    $region27: #{tpu_custom_call.1} parent=1 // pred_check_branch
      %72 = sbr.rel (0) target = $region29
    $region28: #{tpu_custom_call.1} parent=1 // pred_region
      _
    $region29: #{tpu_custom_call.1} parent=1 // pred_fallthru
      _
    // Predicated region
    $region30: #{tpu_custom_call.1} parent=1 // pred_check
      _
    $region31: #{tpu_custom_call.1} parent=1 // pred_check_branch
      %74 = sbr.rel (0) target = $region33
    $region32: #{tpu_custom_call.1} parent=1 // pred_region
      %s76 = ssub.s32 2048, 2048
      %77 = vsyncadd [#allocation9], %s76
      %s78 = sshll.u32 [#allocation10], 4
      %s79 = int_to_ptr.vmem [resolvable:$true] %s78
      %84 = dma.hbm_to_vmem [thread:$0]  %s7, 2048, %s79, [#allocation9], 128, 128, 8
    $region33: #{tpu_custom_call.1} parent=1 // pred_fallthru
      _
    // Predicated region
    $region34: #{tpu_custom_call.1} parent=1 // pred_check
      _
    $region35: #{tpu_custom_call.1} parent=1 // pred_check_branch
      %86 = sbr.rel (0) target = $region37
    $region36: #{tpu_custom_call.1} parent=1 // pred_region
      _
    $region37: #{tpu_custom_call.1} parent=1 // pred_fallthru
      _
    // Predicated region
    $region38: #{tpu_custom_call.1} parent=1 // pred_check
      _
    $region39: #{tpu_custom_call.1} parent=1 // pred_check_branch
      %88 = sbr.rel (0) target = $region41
    $region40: #{tpu_custom_call.1} parent=1 // pred_region
      %s90 = ssub.s32 4096, 4096
      %91 = vsyncadd [#allocation12], %s90
      %s92 = sshll.u32 [#allocation11], 4
      %s93 = int_to_ptr.vmem [resolvable:$true] %s92
      %98 = dma.hbm_to_vmem [thread:$0]  %s9, 4096, %s93, [#allocation12], 128, 128, 8
    $region41: #{tpu_custom_call.1} parent=1 // pred_fallthru
      _
    // Predicated region
    $region42: #{tpu_custom_call.1} parent=1 // pred_check
      _
    $region43: #{tpu_custom_call.1} parent=1 // pred_check_branch
      %100 = sbr.rel (0) target = $region45
    $region44: #{tpu_custom_call.1} parent=1 // pred_region
      _
    $region45: #{tpu_custom_call.1} parent=1 // pred_fallthru
      _
    // Predicated region
    $region46: #{tpu_custom_call.1} parent=1 // pred_check
      _
    $region47: #{tpu_custom_call.1} parent=1 // pred_check_branch
      %102 = sbr.rel (0) target = $region49
    $region48: #{tpu_custom_call.1} parent=1 // pred_region
      %103 = dma.done [#allocation3], 64
    $region49: #{tpu_custom_call.1} parent=1 // pred_fallthru
      _
    // Predicated region
    $region50: #{tpu_custom_call.1} parent=1 // pred_check
      _
    $region51: #{tpu_custom_call.1} parent=1 // pred_check_branch
      %105 = sbr.rel (0) target = $region53
    $region52: #{tpu_custom_call.1} parent=1 // pred_region
      %106 = dma.done [#allocation6], 1024
    $region53: #{tpu_custom_call.1} parent=1 // pred_fallthru
      _
    // Predicated region
    $region54: #{tpu_custom_call.1} parent=1 // pred_check
      _
    $region55: #{tpu_custom_call.1} parent=1 // pred_check_branch
      %108 = sbr.rel (0) target = $region57
    $region56: #{tpu_custom_call.1} parent=1 // pred_region
      %109 = dma.done [#allocation6], 1024
    $region57: #{tpu_custom_call.1} parent=1 // pred_fallthru
      _
    // Predicated region
    $region58: #{tpu_custom_call.1} parent=1 // pred_check
      _
    $region59: #{tpu_custom_call.1} parent=1 // pred_check_branch
      %111 = sbr.rel (0) target = $region61
    $region60: #{tpu_custom_call.1} parent=1 // pred_region
      %112 = dma.done [#allocation9], 1024
    $region61: #{tpu_custom_call.1} parent=1 // pred_fallthru
      _
    // Predicated region
    $region62: #{tpu_custom_call.1} parent=1 // pred_check
      _
    $region63: #{tpu_custom_call.1} parent=1 // pred_check_branch
      %114 = sbr.rel (0) target = $region65
    $region64: #{tpu_custom_call.1} parent=1 // pred_region
      %115 = dma.done [#allocation9], 2048
    $region65: #{tpu_custom_call.1} parent=1 // pred_fallthru
      _
    // Predicated region
    $region66: #{tpu_custom_call.1} parent=1 // pred_check
      _
    $region67: #{tpu_custom_call.1} parent=1 // pred_check_branch
      %117 = sbr.rel (0) target = $region69
    $region68: #{tpu_custom_call.1} parent=1 // pred_region
      %118 = dma.done [#allocation12], 4096
    $region69: #{tpu_custom_call.1} parent=1 // pred_fallthru
      _
    %v120 = vld [vmem:[#allocation2] sm:$0xf]
    %v121 = vld [vmem:[#allocation5] sm:$0xf]
    %v122 = vld [vmem:[#allocation5 + $0x4] sm:$0xf]
    %v123 = vld [vmem:[#allocation5 + $0x8] sm:$0xf]
    %v124 = vld [vmem:[#allocation5 + $0xc] sm:$0xf]
    %v125 = vld [vmem:[#allocation5 + $0x10] sm:$0xf]
    %v126 = vld [vmem:[#allocation5 + $0x14] sm:$0xf]
    %v127 = vld [vmem:[#allocation5 + $0x18] sm:$0xf]
    %v128 = vld [vmem:[#allocation5 + $0x1c] sm:$0xf]
    %v129 = vld [vmem:[#allocation5 + $0x20] sm:$0xf]
    %v130 = vld [vmem:[#allocation5 + $0x24] sm:$0xf]
    %v131 = vld [vmem:[#allocation5 + $0x28] sm:$0xf]
    %v132 = vld [vmem:[#allocation5 + $0x2c] sm:$0xf]
    %v133 = vld [vmem:[#allocation5 + $0x30] sm:$0xf]
    %v134 = vld [vmem:[#allocation5 + $0x34] sm:$0xf]
    %v135 = vld [vmem:[#allocation5 + $0x38] sm:$0xf]
    %v136 = vld [vmem:[#allocation5 + $0x3c] sm:$0xf]
    %v137 = vld [vmem:[%s2] sm:$0x1]
    %v139 = vlaneseq
    %v140 = vshrl.u32 %v139, 7
    %v141 = vsub.s32 0, %v140
    %v142 = vrot.slane %v137, %v141
    %v160 = vunpack.c.l.b16 %v121
    %v161 = vunpack.c.l.b16 %v122
    %v162 = vunpack.c.l.b16 %v123
    %v163 = vunpack.c.l.b16 %v124
    %v164 = vunpack.c.l.b16 %v125
    %v165 = vunpack.c.l.b16 %v126
    %v166 = vunpack.c.l.b16 %v127
    %v167 = vunpack.c.l.b16 %v128
    %v168 = vunpack.c.l.b16 %v129
    %v169 = vunpack.c.l.b16 %v130
    %v170 = vunpack.c.l.b16 %v131
    %v171 = vunpack.c.l.b16 %v132
    %v172 = vunpack.c.l.b16 %v133
    %v173 = vunpack.c.l.b16 %v134
    %v174 = vunpack.c.l.b16 %v135
    %v175 = vunpack.c.l.b16 %v136
    %v176 = vpack.c.b16 %v161, %v160
    %v177 = vpack.c.b16 %v163, %v162
    %v178 = vpack.c.b16 %v165, %v164
    %v179 = vpack.c.b16 %v167, %v166
    %v180 = vpack.c.b16 %v169, %v168
    %v181 = vpack.c.b16 %v171, %v170
    %v182 = vpack.c.b16 %v173, %v172
    %v183 = vpack.c.b16 %v175, %v174
    %192 = vmatprep.subr.bf16.mxu0 0
    %193 = vmatpush1.bf16.msra.mxu0 %v176
    %194 = vmatprep.subr.bf16.mxu0 0
    %195 = vmatpush1.bf16.msra.mxu0 %v177
    %196 = vmatprep.subr.bf16.mxu0 0
    %197 = vmatpush1.bf16.msra.mxu0 %v178
    %198 = vmatprep.subr.bf16.mxu0 0
    %199 = vmatpush1.bf16.msra.mxu0 %v179
    %200 = vmatprep.subr.bf16.mxu0 0
    %201 = vmatpush1.bf16.msra.mxu0 %v180
    %202 = vmatprep.subr.bf16.mxu0 0
    %203 = vmatpush1.bf16.msra.mxu0 %v181
    %204 = vmatprep.subr.bf16.mxu0 0
    %205 = vmatpush1.bf16.msra.mxu0 %v182
    %206 = vmatprep.subr.bf16.mxu0 0
    %207 = vmatpush1.bf16.msra.mxu0 %v183
    %208 = vmatprep.subr.bf16.mxu0 0
    %209 = vmatpush1.bf16.msra.mxu0 0
    %210 = vmatprep.subr.bf16.mxu0 0
    %211 = vmatpush1.bf16.msra.mxu0 0
    %212 = vmatprep.subr.bf16.mxu0 0
    %213 = vmatpush1.bf16.msra.mxu0 0
    %214 = vmatprep.subr.bf16.mxu0 0
    %215 = vmatpush1.bf16.msra.mxu0 0
    %216 = vmatprep.subr.bf16.mxu0 0
    %217 = vmatpush1.bf16.msra.mxu0 0
    %218 = vmatprep.subr.bf16.mxu0 0
    %219 = vmatpush1.bf16.msra.mxu0 0
    %220 = vmatprep.subr.bf16.mxu0 0
    %221 = vmatpush1.bf16.msra.mxu0 0
    %222 = vmatprep.subr.bf16.mxu0 0
    %223 = vmatpush1.bf16.msra.mxu0 0
    %224 = vmatprep.mubr.bf16.mxu0 0
    %225 = vmatmul.mubr.bf16.gmra.mrb[0].mxu0 %v120
    %v226 = vpop.f32.mrb[0].mxu0
    %v227 = vadd.f32 %v142, %v226
    %v228 = vpop.f32.mrb[0].mxu0
    %v229 = vpop.f32.mrb[0].mxu0
    %v230 = vpop.f32.mrb[0].mxu0
    %231 = vdwg.mxu0
    %v232 = vmax.f32 %v227, 0.0
    %v233 = vpack.c.bf16 %v232, %v232
    %v234 = vld [vmem:[#allocation7] sm:$0xf]
    %v235 = vld [vmem:[#allocation7 + $0x4] sm:$0xf]
    %v236 = vld [vmem:[#allocation7 + $0x8] sm:$0xf]
    %v237 = vld [vmem:[#allocation7 + $0xc] sm:$0xf]
    %v238 = vld [vmem:[#allocation7 + $0x10] sm:$0xf]
    %v239 = vld [vmem:[#allocation7 + $0x14] sm:$0xf]
    %v240 = vld [vmem:[#allocation7 + $0x18] sm:$0xf]
    %v241 = vld [vmem:[#allocation7 + $0x1c] sm:$0xf]
    %v242 = vld [vmem:[#allocation7 + $0x20] sm:$0xf]
    %v243 = vld [vmem:[#allocation7 + $0x24] sm:$0xf]
    %v244 = vld [vmem:[#allocation7 + $0x28] sm:$0xf]
    %v245 = vld [vmem:[#allocation7 + $0x2c] sm:$0xf]
    %v246 = vld [vmem:[#allocation7 + $0x30] sm:$0xf]
    %v247 = vld [vmem:[#allocation7 + $0x34] sm:$0xf]
    %v248 = vld [vmem:[#allocation7 + $0x38] sm:$0xf]
    %v249 = vld [vmem:[#allocation7 + $0x3c] sm:$0xf]
    %v250 = vld [vmem:[%s4] sm:$0x1]
    %v252 = vlaneseq
    %v253 = vshrl.u32 %v252, 7
    %v254 = vsub.s32 0, %v253
    %v255 = vrot.slane %v250, %v254
    %v273 = vunpack.c.l.b16 %v234
    %v274 = vunpack.c.l.b16 %v235
    %v275 = vunpack.c.l.b16 %v236
    %v276 = vunpack.c.l.b16 %v237
    %v277 = vunpack.c.l.b16 %v238
    %v278 = vunpack.c.l.b16 %v239
    %v279 = vunpack.c.l.b16 %v240
    %v280 = vunpack.c.l.b16 %v241
    %v281 = vunpack.c.l.b16 %v242
    %v282 = vunpack.c.l.b16 %v243
    %v283 = vunpack.c.l.b16 %v244
    %v284 = vunpack.c.l.b16 %v245
    %v285 = vunpack.c.l.b16 %v246
    %v286 = vunpack.c.l.b16 %v247
    %v287 = vunpack.c.l.b16 %v248
    %v288 = vunpack.c.l.b16 %v249
    %v289 = vpack.c.b16 %v274, %v273
    %v290 = vpack.c.b16 %v276, %v275
    %v291 = vpack.c.b16 %v278, %v277
    %v292 = vpack.c.b16 %v280, %v279
    %v293 = vpack.c.b16 %v282, %v281
    %v294 = vpack.c.b16 %v284, %v283
    %v295 = vpack.c.b16 %v286, %v285
    %v296 = vpack.c.b16 %v288, %v287
    %305 = vmatprep.subr.bf16.mxu0 0
    %306 = vmatpush1.bf16.msra.mxu0 %v289
    %307 = vmatprep.subr.bf16.mxu0 0
    %308 = vmatpush1.bf16.msra.mxu0 %v290
    %309 = vmatprep.subr.bf16.mxu0 0
    %310 = vmatpush1.bf16.msra.mxu0 %v291
    %311 = vmatprep.subr.bf16.mxu0 0
    %312 = vmatpush1.bf16.msra.mxu0 %v292
    %313 = vmatprep.subr.bf16.mxu0 0
    %314 = vmatpush1.bf16.msra.mxu0 %v293
    %315 = vmatprep.subr.bf16.mxu0 0
    %316 = vmatpush1.bf16.msra.mxu0 %v294
    %317 = vmatprep.subr.bf16.mxu0 0
    %318 = vmatpush1.bf16.msra.mxu0 %v295
    %319 = vmatprep.subr.bf16.mxu0 0
    %320 = vmatpush1.bf16.msra.mxu0 %v296
    %321 = vmatprep.subr.bf16.mxu0 0
    %322 = vmatpush1.bf16.msra.mxu0 0
    %323 = vmatprep.subr.bf16.mxu0 0
    %324 = vmatpush1.bf16.msra.mxu0 0
    %325 = vmatprep.subr.bf16.mxu0 0
    %326 = vmatpush1.bf16.msra.mxu0 0
    %327 = vmatprep.subr.bf16.mxu0 0
    %328 = vmatpush1.bf16.msra.mxu0 0
    %329 = vmatprep.subr.bf16.mxu0 0
    %330 = vmatpush1.bf16.msra.mxu0 0
    %331 = vmatprep.subr.bf16.mxu0 0
    %332 = vmatpush1.bf16.msra.mxu0 0
    %333 = vmatprep.subr.bf16.mxu0 0
    %334 = vmatpush1.bf16.msra.mxu0 0
    %335 = vmatprep.subr.bf16.mxu0 0
    %336 = vmatpush1.bf16.msra.mxu0 0
    %337 = vmatprep.mubr.bf16.mxu0 0
    %338 = vmatmul.mubr.bf16.gmra.mrb[0].mxu0 %v233
    %v339 = vpop.f32.mrb[0].mxu0
    %v340 = vadd.f32 %v255, %v339
    %v341 = vpop.f32.mrb[0].mxu0
    %v342 = vpop.f32.mrb[0].mxu0
    %v343 = vpop.f32.mrb[0].mxu0
    %344 = vdwg.mxu0
    %v345 = vmax.f32 %v340, 0.0
    %v346 = vpack.c.bf16 %v345, %v345
    %v347 = vld [vmem:[#allocation8] sm:$0xf]
    %v348 = vld [vmem:[#allocation8 + $0x4] sm:$0xf]
    %v349 = vld [vmem:[#allocation8 + $0x8] sm:$0xf]
    %v350 = vld [vmem:[#allocation8 + $0xc] sm:$0xf]
    %v351 = vld [vmem:[#allocation8 + $0x10] sm:$0xf]
    %v352 = vld [vmem:[#allocation8 + $0x14] sm:$0xf]
    %v353 = vld [vmem:[#allocation8 + $0x18] sm:$0xf]
    %v354 = vld [vmem:[#allocation8 + $0x1c] sm:$0xf]
    %v355 = vld [vmem:[#allocation8 + $0x20] sm:$0xf]
    %v356 = vld [vmem:[#allocation8 + $0x24] sm:$0xf]
    %v357 = vld [vmem:[#allocation8 + $0x28] sm:$0xf]
    %v358 = vld [vmem:[#allocation8 + $0x2c] sm:$0xf]
    %v359 = vld [vmem:[#allocation8 + $0x30] sm:$0xf]
    %v360 = vld [vmem:[#allocation8 + $0x34] sm:$0xf]
    %v361 = vld [vmem:[#allocation8 + $0x38] sm:$0xf]
    %v362 = vld [vmem:[#allocation8 + $0x3c] sm:$0xf]
    %v363 = vld [vmem:[%s6] sm:$0x1]
    %v365 = vlaneseq
    %v366 = vshrl.u32 %v365, 7
    %v367 = vsub.s32 0, %v366
    %v368 = vrot.slane %v363, %v367
    %v386 = vunpack.c.l.b16 %v347
    %v387 = vunpack.c.l.b16 %v348
    %v388 = vunpack.c.l.b16 %v349
    %v389 = vunpack.c.l.b16 %v350
    %v390 = vunpack.c.l.b16 %v351
    %v391 = vunpack.c.l.b16 %v352
    %v392 = vunpack.c.l.b16 %v353
    %v393 = vunpack.c.l.b16 %v354
    %v394 = vunpack.c.l.b16 %v355
    %v395 = vunpack.c.l.b16 %v356
    %v396 = vunpack.c.l.b16 %v357
    %v397 = vunpack.c.l.b16 %v358
    %v398 = vunpack.c.l.b16 %v359
    %v399 = vunpack.c.l.b16 %v360
    %v400 = vunpack.c.l.b16 %v361
    %v401 = vunpack.c.l.b16 %v362
    %v402 = vpack.c.b16 %v387, %v386
    %v403 = vpack.c.b16 %v389, %v388
    %v404 = vpack.c.b16 %v391, %v390
    %v405 = vpack.c.b16 %v393, %v392
    %v406 = vpack.c.b16 %v395, %v394
    %v407 = vpack.c.b16 %v397, %v396
    %v408 = vpack.c.b16 %v399, %v398
    %v409 = vpack.c.b16 %v401, %v400
    %418 = vmatprep.subr.bf16.mxu0 0
    %419 = vmatpush1.bf16.msra.mxu0 %v402
    %420 = vmatprep.subr.bf16.mxu0 0
    %421 = vmatpush1.bf16.msra.mxu0 %v403
    %422 = vmatprep.subr.bf16.mxu0 0
    %423 = vmatpush1.bf16.msra.mxu0 %v404
    %424 = vmatprep.subr.bf16.mxu0 0
    %425 = vmatpush1.bf16.msra.mxu0 %v405
    %426 = vmatprep.subr.bf16.mxu0 0
    %427 = vmatpush1.bf16.msra.mxu0 %v406
    %428 = vmatprep.subr.bf16.mxu0 0
    %429 = vmatpush1.bf16.msra.mxu0 %v407
    %430 = vmatprep.subr.bf16.mxu0 0
    %431 = vmatpush1.bf16.msra.mxu0 %v408
    %432 = vmatprep.subr.bf16.mxu0 0
    %433 = vmatpush1.bf16.msra.mxu0 %v409
    %434 = vmatprep.subr.bf16.mxu0 0
    %435 = vmatpush1.bf16.msra.mxu0 0
    %436 = vmatprep.subr.bf16.mxu0 0
    %437 = vmatpush1.bf16.msra.mxu0 0
    %438 = vmatprep.subr.bf16.mxu0 0
    %439 = vmatpush1.bf16.msra.mxu0 0
    %440 = vmatprep.subr.bf16.mxu0 0
    %441 = vmatpush1.bf16.msra.mxu0 0
    %442 = vmatprep.subr.bf16.mxu0 0
    %443 = vmatpush1.bf16.msra.mxu0 0
    %444 = vmatprep.subr.bf16.mxu0 0
    %445 = vmatpush1.bf16.msra.mxu0 0
    %446 = vmatprep.subr.bf16.mxu0 0
    %447 = vmatpush1.bf16.msra.mxu0 0
    %448 = vmatprep.subr.bf16.mxu0 0
    %449 = vmatpush1.bf16.msra.mxu0 0
    %450 = vmatprep.mubr.bf16.mxu0 0
    %451 = vmatmul.mubr.bf16.gmra.mrb[0].mxu0 %v346
    %v452 = vpop.f32.mrb[0].mxu0
    %v453 = vadd.f32 %v368, %v452
    %v454 = vpop.f32.mrb[0].mxu0
    %v455 = vpop.f32.mrb[0].mxu0
    %v456 = vpop.f32.mrb[0].mxu0
    %457 = vdwg.mxu0
    %v458 = vpack.c.bf16 %v453, %v453
    %v459 = vld [vmem:[#allocation10] sm:$0xff]
    %v460 = vld [vmem:[#allocation10 + $0x8] sm:$0xff]
    %v461 = vld [vmem:[#allocation10 + $0x10] sm:$0xff]
    %v462 = vld [vmem:[#allocation10 + $0x18] sm:$0xff]
    %v463 = vld [vmem:[#allocation10 + $0x20] sm:$0xff]
    %v464 = vld [vmem:[#allocation10 + $0x28] sm:$0xff]
    %v465 = vld [vmem:[#allocation10 + $0x30] sm:$0xff]
    %v466 = vld [vmem:[#allocation10 + $0x38] sm:$0xff]
    %v467 = vld [vmem:[#allocation10 + $0x40] sm:$0xff]
    %v468 = vld [vmem:[#allocation10 + $0x48] sm:$0xff]
    %v469 = vld [vmem:[#allocation10 + $0x50] sm:$0xff]
    %v470 = vld [vmem:[#allocation10 + $0x58] sm:$0xff]
    %v471 = vld [vmem:[#allocation10 + $0x60] sm:$0xff]
    %v472 = vld [vmem:[#allocation10 + $0x68] sm:$0xff]
    %v473 = vld [vmem:[#allocation10 + $0x70] sm:$0xff]
    %v474 = vld [vmem:[#allocation10 + $0x78] sm:$0xff]
    %v475 = vld [vmem:[%s8] sm:$0x3]
    %v477 = vlaneseq
    %v478 = vshrl.u32 %v477, 7
    %v479 = vsub.s32 0, %v478
    %v480 = vrot.slane %v475, %v479
    %v481 = vlaneseq
    %v482 = vshrl.u32 %v481, 7
    %v483 = vsub.s32 1, %v482
    %v484 = vrot.slane %v475, %v483
    %v503 = vunpack.c.l.b16 %v459
    %v504 = vunpack.c.h.b16 %v459
    %v505 = vunpack.c.l.b16 %v460
    %v506 = vunpack.c.h.b16 %v460
    %v507 = vunpack.c.l.b16 %v461
    %v508 = vunpack.c.h.b16 %v461
    %v509 = vunpack.c.l.b16 %v462
    %v510 = vunpack.c.h.b16 %v462
    %v511 = vunpack.c.l.b16 %v463
    %v512 = vunpack.c.h.b16 %v463
    %v513 = vunpack.c.l.b16 %v464
    %v514 = vunpack.c.h.b16 %v464
    %v515 = vunpack.c.l.b16 %v465
    %v516 = vunpack.c.h.b16 %v465
    %v517 = vunpack.c.l.b16 %v466
    %v518 = vunpack.c.h.b16 %v466
    %v519 = vunpack.c.l.b16 %v467
    %v520 = vunpack.c.h.b16 %v467
    %v521 = vunpack.c.l.b16 %v468
    %v522 = vunpack.c.h.b16 %v468
    %v523 = vunpack.c.l.b16 %v469
    %v524 = vunpack.c.h.b16 %v469
    %v525 = vunpack.c.l.b16 %v470
    %v526 = vunpack.c.h.b16 %v470
    %v527 = vunpack.c.l.b16 %v471
    %v528 = vunpack.c.h.b16 %v471
    %v529 = vunpack.c.l.b16 %v472
    %v530 = vunpack.c.h.b16 %v472
    %v531 = vunpack.c.l.b16 %v473
    %v532 = vunpack.c.h.b16 %v473
    %v533 = vunpack.c.l.b16 %v474
    %v534 = vunpack.c.h.b16 %v474
    %v535 = vpack.c.b16 %v505, %v503
    %v536 = vpack.c.b16 %v506, %v504
    %v537 = vpack.c.b16 %v509, %v507
    %v538 = vpack.c.b16 %v510, %v508
    %v539 = vpack.c.b16 %v513, %v511
    %v540 = vpack.c.b16 %v514, %v512
    %v541 = vpack.c.b16 %v517, %v515
    %v542 = vpack.c.b16 %v518, %v516
    %v543 = vpack.c.b16 %v521, %v519
    %v544 = vpack.c.b16 %v522, %v520
    %v545 = vpack.c.b16 %v525, %v523
    %v546 = vpack.c.b16 %v526, %v524
    %v547 = vpack.c.b16 %v529, %v527
    %v548 = vpack.c.b16 %v530, %v528
    %v549 = vpack.c.b16 %v533, %v531
    %v550 = vpack.c.b16 %v534, %v532
    %567 = vmatprep.subr.bf16.mxu0 %v536
    %568 = vmatpush1.bf16.msra.mxu0 %v535
    %569 = vmatprep.subr.bf16.mxu0 %v538
    %570 = vmatpush1.bf16.msra.mxu0 %v537
    %571 = vmatprep.subr.bf16.mxu0 %v540
    %572 = vmatpush1.bf16.msra.mxu0 %v539
    %573 = vmatprep.subr.bf16.mxu0 %v542
    %574 = vmatpush1.bf16.msra.mxu0 %v541
    %575 = vmatprep.subr.bf16.mxu0 %v544
    %576 = vmatpush1.bf16.msra.mxu0 %v543
    %577 = vmatprep.subr.bf16.mxu0 %v546
    %578 = vmatpush1.bf16.msra.mxu0 %v545
    %579 = vmatprep.subr.bf16.mxu0 %v548
    %580 = vmatpush1.bf16.msra.mxu0 %v547
    %581 = vmatprep.subr.bf16.mxu0 %v550
    %582 = vmatpush1.bf16.msra.mxu0 %v549
    %583 = vmatprep.subr.bf16.mxu0 0
    %584 = vmatpush1.bf16.msra.mxu0 0
    %585 = vmatprep.subr.bf16.mxu0 0
    %586 = vmatpush1.bf16.msra.mxu0 0
    %587 = vmatprep.subr.bf16.mxu0 0
    %588 = vmatpush1.bf16.msra.mxu0 0
    %589 = vmatprep.subr.bf16.mxu0 0
    %590 = vmatpush1.bf16.msra.mxu0 0
    %591 = vmatprep.subr.bf16.mxu0 0
    %592 = vmatpush1.bf16.msra.mxu0 0
    %593 = vmatprep.subr.bf16.mxu0 0
    %594 = vmatpush1.bf16.msra.mxu0 0
    %595 = vmatprep.subr.bf16.mxu0 0
    %596 = vmatpush1.bf16.msra.mxu0 0
    %597 = vmatprep.subr.bf16.mxu0 0
    %598 = vmatpush1.bf16.msra.mxu0 0
    %599 = vmatprep.mubr.bf16.mxu0 0
    %600 = vmatmul.mubr.bf16.gmra.mrb[0].mxu0 %v458
    %v601 = vpop.f32.mrb[0].mxu0
    %v602 = vadd.f32 %v480, %v601
    %v603 = vpop.f32.mrb[0].mxu0
    %v604 = vadd.f32 %v484, %v603
    %v605 = vpop.f32.mrb[0].mxu0
    %v606 = vpop.f32.mrb[0].mxu0
    %607 = vdwg.mxu0
    %v608 = vmax.f32 %v602, 0.0
    %v609 = vmax.f32 %v604, 0.0
    %v610 = vpack.c.bf16 %v608, %v608
    %v611 = vpack.c.bf16 %v609, %v609
    %v612 = vld [vmem:[#allocation11] sm:$0xff]
    %v613 = vld [vmem:[#allocation11 + $0x8] sm:$0xff]
    %v614 = vld [vmem:[#allocation11 + $0x10] sm:$0xff]
    %v615 = vld [vmem:[#allocation11 + $0x18] sm:$0xff]
    %v616 = vld [vmem:[#allocation11 + $0x20] sm:$0xff]
    %v617 = vld [vmem:[#allocation11 + $0x28] sm:$0xff]
    %v618 = vld [vmem:[#allocation11 + $0x30] sm:$0xff]
    %v619 = vld [vmem:[#allocation11 + $0x38] sm:$0xff]
    %v620 = vld [vmem:[#allocation11 + $0x40] sm:$0xff]
    %v621 = vld [vmem:[#allocation11 + $0x48] sm:$0xff]
    %v622 = vld [vmem:[#allocation11 + $0x50] sm:$0xff]
    %v623 = vld [vmem:[#allocation11 + $0x58] sm:$0xff]
    %v624 = vld [vmem:[#allocation11 + $0x60] sm:$0xff]
    %v625 = vld [vmem:[#allocation11 + $0x68] sm:$0xff]
    %v626 = vld [vmem:[#allocation11 + $0x70] sm:$0xff]
    %v627 = vld [vmem:[#allocation11 + $0x78] sm:$0xff]
    %v628 = vld [vmem:[#allocation11 + $0x80] sm:$0xff]
    %v629 = vld [vmem:[#allocation11 + $0x88] sm:$0xff]
    %v630 = vld [vmem:[#allocation11 + $0x90] sm:$0xff]
    %v631 = vld [vmem:[#allocation11 + $0x98] sm:$0xff]
    %v632 = vld [vmem:[#allocation11 + $0xa0] sm:$0xff]
    %v633 = vld [vmem:[#allocation11 + $0xa8] sm:$0xff]
    %v634 = vld [vmem:[#allocation11 + $0xb0] sm:$0xff]
    %v635 = vld [vmem:[#allocation11 + $0xb8] sm:$0xff]
    %v636 = vld [vmem:[#allocation11 + $0xc0] sm:$0xff]
    %v637 = vld [vmem:[#allocation11 + $0xc8] sm:$0xff]
    %v638 = vld [vmem:[#allocation11 + $0xd0] sm:$0xff]
    %v639 = vld [vmem:[#allocation11 + $0xd8] sm:$0xff]
    %v640 = vld [vmem:[#allocation11 + $0xe0] sm:$0xff]
    %v641 = vld [vmem:[#allocation11 + $0xe8] sm:$0xff]
    %v642 = vld [vmem:[#allocation11 + $0xf0] sm:$0xff]
    %v643 = vld [vmem:[#allocation11 + $0xf8] sm:$0xff]
    %v644 = vld [vmem:[%s10] sm:$0x3]
    %v646 = vlaneseq
    %v647 = vshrl.u32 %v646, 7
    %v648 = vsub.s32 0, %v647
    %v649 = vrot.slane %v644, %v648
    %v650 = vlaneseq
    %v651 = vshrl.u32 %v650, 7
    %v652 = vsub.s32 1, %v651
    %v653 = vrot.slane %v644, %v652
    %v688 = vunpack.c.l.b16 %v612
    %v689 = vunpack.c.h.b16 %v612
    %v690 = vunpack.c.l.b16 %v613
    %v691 = vunpack.c.h.b16 %v613
    %v692 = vunpack.c.l.b16 %v614
    %v693 = vunpack.c.h.b16 %v614
    %v694 = vunpack.c.l.b16 %v615
    %v695 = vunpack.c.h.b16 %v615
    %v696 = vunpack.c.l.b16 %v616
    %v697 = vunpack.c.h.b16 %v616
    %v698 = vunpack.c.l.b16 %v617
    %v699 = vunpack.c.h.b16 %v617
    %v700 = vunpack.c.l.b16 %v618
    %v701 = vunpack.c.h.b16 %v618
    %v702 = vunpack.c.l.b16 %v619
    %v703 = vunpack.c.h.b16 %v619
    %v704 = vunpack.c.l.b16 %v620
    %v705 = vunpack.c.h.b16 %v620
    %v706 = vunpack.c.l.b16 %v621
    %v707 = vunpack.c.h.b16 %v621
    %v708 = vunpack.c.l.b16 %v622
    %v709 = vunpack.c.h.b16 %v622
    %v710 = vunpack.c.l.b16 %v623
    %v711 = vunpack.c.h.b16 %v623
    %v712 = vunpack.c.l.b16 %v624
    %v713 = vunpack.c.h.b16 %v624
    %v714 = vunpack.c.l.b16 %v625
    %v715 = vunpack.c.h.b16 %v625
    %v716 = vunpack.c.l.b16 %v626
    %v717 = vunpack.c.h.b16 %v626
    %v718 = vunpack.c.l.b16 %v627
    %v719 = vunpack.c.h.b16 %v627
    %v720 = vunpack.c.l.b16 %v628
    %v721 = vunpack.c.h.b16 %v628
    %v722 = vunpack.c.l.b16 %v629
    %v723 = vunpack.c.h.b16 %v629
    %v724 = vunpack.c.l.b16 %v630
    %v725 = vunpack.c.h.b16 %v630
    %v726 = vunpack.c.l.b16 %v631
    %v727 = vunpack.c.h.b16 %v631
    %v728 = vunpack.c.l.b16 %v632
    %v729 = vunpack.c.h.b16 %v632
    %v730 = vunpack.c.l.b16 %v633
    %v731 = vunpack.c.h.b16 %v633
    %v732 = vunpack.c.l.b16 %v634
    %v733 = vunpack.c.h.b16 %v634
    %v734 = vunpack.c.l.b16 %v635
    %v735 = vunpack.c.h.b16 %v635
    %v736 = vunpack.c.l.b16 %v636
    %v737 = vunpack.c.h.b16 %v636
    %v738 = vunpack.c.l.b16 %v637
    %v739 = vunpack.c.h.b16 %v637
    %v740 = vunpack.c.l.b16 %v638
    %v741 = vunpack.c.h.b16 %v638
    %v742 = vunpack.c.l.b16 %v639
    %v743 = vunpack.c.h.b16 %v639
    %v744 = vunpack.c.l.b16 %v640
    %v745 = vunpack.c.h.b16 %v640
    %v746 = vunpack.c.l.b16 %v641
    %v747 = vunpack.c.h.b16 %v641
    %v748 = vunpack.c.l.b16 %v642
    %v749 = vunpack.c.h.b16 %v642
    %v750 = vunpack.c.l.b16 %v643
    %v751 = vunpack.c.h.b16 %v643
    %v752 = vpack.c.b16 %v690, %v688
    %v753 = vpack.c.b16 %v691, %v689
    %v754 = vpack.c.b16 %v694, %v692
    %v755 = vpack.c.b16 %v695, %v693
    %v756 = vpack.c.b16 %v698, %v696
    %v757 = vpack.c.b16 %v699, %v697
    %v758 = vpack.c.b16 %v702, %v700
    %v759 = vpack.c.b16 %v703, %v701
    %v760 = vpack.c.b16 %v706, %v704
    %v761 = vpack.c.b16 %v707, %v705
    %v762 = vpack.c.b16 %v710, %v708
    %v763 = vpack.c.b16 %v711, %v709
    %v764 = vpack.c.b16 %v714, %v712
    %v765 = vpack.c.b16 %v715, %v713
    %v766 = vpack.c.b16 %v718, %v716
    %v767 = vpack.c.b16 %v719, %v717
    %v768 = vpack.c.b16 %v722, %v720
    %v769 = vpack.c.b16 %v723, %v721
    %v770 = vpack.c.b16 %v726, %v724
    %v771 = vpack.c.b16 %v727, %v725
    %v772 = vpack.c.b16 %v730, %v728
    %v773 = vpack.c.b16 %v731, %v729
    %v774 = vpack.c.b16 %v734, %v732
    %v775 = vpack.c.b16 %v735, %v733
    %v776 = vpack.c.b16 %v738, %v736
    %v777 = vpack.c.b16 %v739, %v737
    %v778 = vpack.c.b16 %v742, %v740
    %v779 = vpack.c.b16 %v743, %v741
    %v780 = vpack.c.b16 %v746, %v744
    %v781 = vpack.c.b16 %v747, %v745
    %v782 = vpack.c.b16 %v750, %v748
    %v783 = vpack.c.b16 %v751, %v749
    %816 = vmatprep.subr.bf16.mxu0 %v753
    %817 = vmatpush1.bf16.msra.mxu0 %v752
    %818 = vmatprep.subr.bf16.mxu0 %v755
    %819 = vmatpush1.bf16.msra.mxu0 %v754
    %820 = vmatprep.subr.bf16.mxu0 %v757
    %821 = vmatpush1.bf16.msra.mxu0 %v756
    %822 = vmatprep.subr.bf16.mxu0 %v759
    %823 = vmatpush1.bf16.msra.mxu0 %v758
    %824 = vmatprep.subr.bf16.mxu0 %v761
    %825 = vmatpush1.bf16.msra.mxu0 %v760
    %826 = vmatprep.subr.bf16.mxu0 %v763
    %827 = vmatpush1.bf16.msra.mxu0 %v762
    %828 = vmatprep.subr.bf16.mxu0 %v765
    %829 = vmatpush1.bf16.msra.mxu0 %v764
    %830 = vmatprep.subr.bf16.mxu0 %v767
    %831 = vmatpush1.bf16.msra.mxu0 %v766
    %832 = vmatprep.subr.bf16.mxu0 %v769
    %833 = vmatpush1.bf16.msra.mxu0 %v768
    %834 = vmatprep.subr.bf16.mxu0 %v771
    %835 = vmatpush1.bf16.msra.mxu0 %v770
    %836 = vmatprep.subr.bf16.mxu0 %v773
    %837 = vmatpush1.bf16.msra.mxu0 %v772
    %838 = vmatprep.subr.bf16.mxu0 %v775
    %839 = vmatpush1.bf16.msra.mxu0 %v774
    %840 = vmatprep.subr.bf16.mxu0 %v777
    %841 = vmatpush1.bf16.msra.mxu0 %v776
    %842 = vmatprep.subr.bf16.mxu0 %v779
    %843 = vmatpush1.bf16.msra.mxu0 %v778
    %844 = vmatprep.subr.bf16.mxu0 %v781
    %845 = vmatpush1.bf16.msra.mxu0 %v780
    %846 = vmatprep.subr.bf16.mxu0 %v783
    %847 = vmatpush1.bf16.msra.mxu0 %v782
    %848 = vmatprep.mubr.bf16.mxu0 %v611
    %849 = vmatmul.mubr.bf16.gmra.mrb[0].mxu0 %v610
    %v850 = vpop.f32.mrb[0].mxu0
    %v851 = vadd.f32 %v649, %v850
    %v852 = vpop.f32.mrb[0].mxu0
    %v853 = vadd.f32 %v653, %v852
    %v854 = vpop.f32.mrb[0].mxu0
    %v855 = vpop.f32.mrb[0].mxu0
    %856 = vdwg.mxu0
    %857 = vadd.xlane.f32.xlu0 %v851
    %v858 = vpop.xlane.xlu0 %857
    %v859 = vmul.f32 %v858, 0.05
    %v860 = vadd.f32 %v853, %v851
    %v861 = vsub.f32 %v860, %v859
    %862 = vst [vmem:[#allocation13] sm:$0xff] %v861
    // Predicated region
    $region70: #{tpu_custom_call.1} parent=1 // pred_check
      _
    $region71: #{tpu_custom_call.1} parent=1 // pred_check_branch
      %864 = sbr.rel (0) target = $region73
    $region72: #{tpu_custom_call.1} parent=1 // pred_region
      %s866 = ssub.s32 128, 128
      %867 = vsyncadd [#allocation4], %s866
      %s869 = sshll.u32 [#allocation13], 4
      %s870 = int_to_ptr.vmem [resolvable:$true] %s869
      %872 = dma.vmem_to_hbm [thread:$0]  %s870, 128, %s11, [#allocation4]
    $region73: #{tpu_custom_call.1} parent=1 // pred_fallthru
      _
    // Predicated region
    $region74: #{tpu_custom_call.1} parent=1 // pred_check
      _
    $region75: #{tpu_custom_call.1} parent=1 // pred_check_branch
      %874 = sbr.rel (0) target = $region77
    $region76: #{tpu_custom_call.1} parent=1 // pred_region
      %875 = dma.done [#allocation4], 128
    $region77: #{tpu_custom_call.1} parent=1 // pred_fallthru
      _
    %876 = vsyncpa [#allocation3], 1
    %877 = vsyncpa [#allocation6], 1
    %878 = vsyncpa [#allocation9], 1
    %879 = vsyncpa [#allocation12], 1
    %880 = vsyncpa [#allocation4], 1

</llo_original>
